<compile_context>
chip_gen: v7x
topology: tpu7x:2x2x1
jax: 0.10.0
libtpu: 0.0.40
codegen_flags: <defaults>
</compile_context>

<pallas_src>
import functools

import jax
import jax.numpy as jnp
from jax.experimental import pallas as pl
from jax.experimental.pallas import tpu as pltpu

LANES = 128


def _round_down(x, mult):
    return (x // mult) * mult


def _target_block_rows():
    # v5e: 16 MiB scoped-VMEM default -> ~8 MiB double-buffered footprint
    # (2 inputs x 2 buffers x 2 MiB).  v6e/v7x: 32 MiB default -> 8192-row
    # blocks (16 MiB f32 double-buffered) fit comfortably.
    try:
        kind = jax.devices()[0].device_kind.lower()
    except Exception:
        kind = ""
    return 4096 if "v5" in kind else 8192


def _dice_partials_kernel(logits_ref, targets_ref, int_ref, p_ref, t_ref,
                          *, m_rows, block_rows, needs_mask):
    """Accumulates per-core (8, 128) partial sums of p*t, p and t."""
    r = pl.program_id(1)

    @pl.when(r == 0)
    def _init():
        int_ref[...] = jnp.zeros_like(int_ref)
        p_ref[...] = jnp.zeros_like(p_ref)
        t_ref[...] = jnp.zeros_like(t_ref)

    x = logits_ref[...].astype(jnp.float32)
    tgt = targets_ref[...].astype(jnp.float32)
    # sigmoid(x) = 1 / (1 + exp(-x)): exp and the approximate reciprocal both
    # run on the EUP slot, keeping the divide's Newton steps off the VALU.
    probs = pl.reciprocal(jnp.float32(1.0) + jnp.exp(-x), approx=True)

    sub = block_rows // 8

    def _accumulate(p, t):
        # (block_rows, 128) -> (sub, 8, 128) is a tile-aligned regrouping of
        # the sublane-major dim; the axis-0 sum is a pure-VALU vreg tree.
        # Cross-sublane / cross-lane collapse is deferred to the wrapper.
        int_ref[...] += jnp.sum((p * t).reshape(sub, 8, LANES), axis=0)[None]
        p_ref[...] += jnp.sum(p.reshape(sub, 8, LANES), axis=0)[None]
        t_ref[...] += jnp.sum(t.reshape(sub, 8, LANES), axis=0)[None]

    if needs_mask:
        # Row-level masking only; the <128-element tail is handled in the
        # wrapper, so every valid row has 128 valid lanes.  Row counts stay
        # well inside int32 for any realistic tensor (rows = n / 128).
        b = pl.program_id(0) * pl.num_programs(1) + r
        rows_valid = m_rows - b * block_rows  # <= 0 for duplicate/empty blocks

        @pl.when(rows_valid >= block_rows)
        def _full_block():           # hot path: no iota / compare / select
            _accumulate(probs, tgt)

        @pl.when(rows_valid < block_rows)
        def _edge_block():
            # Mask AFTER the sigmoid: garbage rows past the array edge may be
            # NaN/Inf bit patterns; the select discards them either way.
            row_ids = jax.lax.broadcasted_iota(jnp.int32, probs.shape, 0)
            keep = row_ids < rows_valid
            _accumulate(jnp.where(keep, probs, jnp.float32(0.0)),
                        jnp.where(keep, tgt, jnp.float32(0.0)))
    else:
        _accumulate(probs, tgt)


def dice_loss(logits, targets, smooth=1e-8, *, max_block_rows=None):
    """Pallas implementation of DiceLoss.forward(logits, targets)."""
    n = int(logits.size)
    assert int(targets.size) == n and n > 0

    lf = logits.reshape(-1)
    tf = targets.reshape(-1)

    n_aligned = _round_down(n, LANES)
    m = n_aligned // LANES
    zero = jnp.float32(0.0)

    if m < 8:
        # Tiny input (< 1024 elements): launch overhead dominates any kernel.
        probs = jax.nn.sigmoid(lf.astype(jnp.float32))
        t = tf.astype(jnp.float32)
        intsxn, psum, tsum = jnp.sum(probs * t), jnp.sum(probs), jnp.sum(t)
    else:
        # <128-element tail handled here instead of jnp.pad-ing the whole
        # tensor (pad would re-materialize both inputs in HBM).
        if n_aligned < n:
            tp = jax.nn.sigmoid(lf[n_aligned:].astype(jnp.float32))
            tt = tf[n_aligned:].astype(jnp.float32)
            tail = (jnp.sum(tp * tt), jnp.sum(tp), jnp.sum(tt))
        else:
            tail = (zero, zero, zero)

        lf2 = lf[:n_aligned].reshape(m, LANES)   # lane-dense slab
        tf2 = tf[:n_aligned].reshape(m, LANES)

        target_rows = max_block_rows if max_block_rows else _target_block_rows()
        block_rows = max(8, min(_round_down(target_rows, 8), _round_down(m, 8)))
        nblocks = pl.cdiv(m, block_rows)
        # Leading "parallel" axis of size 2 -> both TensorCores on v7x; a
        # single-core chip just runs the two halves back to back.
        num_cores = 2 if nblocks >= 2 else 1
        blocks_per_core = pl.cdiv(nblocks, num_cores)
        total_blocks = num_cores * blocks_per_core
        needs_mask = (m % block_rows != 0) or (total_blocks != nblocks)

        def in_map(c, r):
            # Clamp duplicate trailing blocks (odd nblocks) to a valid block;
            # the kernel fully masks them via its unclamped row count.
            return (jnp.minimum(c * blocks_per_core + r, nblocks - 1), 0)

        def out_map(c, r):
            return (c, 0, 0)

        kernel = functools.partial(
            _dice_partials_kernel, m_rows=m, block_rows=block_rows,
            needs_mask=needs_mask)

        part_shape = jax.ShapeDtypeStruct((num_cores, 8, LANES), jnp.float32)
        cost = pl.CostEstimate(
            flops=6 * n_aligned,
            transcendentals=2 * n_aligned,
            bytes_accessed=int(lf2.nbytes) + int(tf2.nbytes)
            + 3 * num_cores * 8 * LANES * 4)

        # TODO(synk): if still VALU-bound on v7x, offload the axis-0 sums to
        # the idle MXU via a ones-row matmul (bundle-verify first).
        int_p, p_p, t_p = pl.pallas_call(
            kernel,
            out_shape=(part_shape, part_shape, part_shape),
            grid_spec=pltpu.PrefetchScalarGridSpec(
                num_scalar_prefetch=0,
                grid=(num_cores, blocks_per_core),
                in_specs=[
                    pl.BlockSpec((block_rows, LANES), in_map),
                    pl.BlockSpec((block_rows, LANES), in_map),
                ],
                out_specs=(
                    pl.BlockSpec((1, 8, LANES), out_map),
                    pl.BlockSpec((1, 8, LANES), out_map),
                    pl.BlockSpec((1, 8, LANES), out_map),
                ),
            ),
            compiler_params=pltpu.CompilerParams(
                dimension_semantics=("parallel", "arbitrary"),
                vmem_limit_bytes=32 * 1024 * 1024,
            ),
            cost_estimate=cost,
        )(lf2, tf2)

        intsxn = jnp.sum(int_p) + tail[0]
        psum = jnp.sum(p_p) + tail[1]
        tsum = jnp.sum(t_p) + tail[2]

    smooth = jnp.float32(smooth)
    dice = (jnp.float32(2.0) * intsxn + smooth) / (psum + tsum + smooth)
    return jnp.float32(1.0) - dice


def dice_loss_ref(logits, targets, smooth=1e-8):
    probs = jax.nn.sigmoid(logits.astype(jnp.float32)).reshape(-1)
    t = targets.astype(jnp.float32).reshape(-1)
    intsxn = jnp.sum(probs * t)
    return 1.0 - (2.0 * intsxn + smooth) / (jnp.sum(probs) + jnp.sum(t) + smooth)


def _check(shape, key, **kw):
    k1, k2 = jax.random.split(key)
    logits = jax.random.normal(k1, shape, dtype=jnp.float32)
    targets = (jax.random.uniform(k2, shape) > 0.5).astype(jnp.float32)
    got = jax.block_until_ready(dice_loss(logits, targets, **kw))
    ref = jax.block_until_ready(dice_loss_ref(logits, targets))
    # Tolerance bounded by the approximate EUP reciprocal used for sigmoid.
    assert jnp.allclose(got, ref, atol=1e-3, rtol=1e-3), (shape, kw, got, ref)


if __name__ == "__main__":
    key = jax.random.PRNGKey(0)
    k1, k2, k3, k4 = jax.random.split(key, 4)

    # Small segmentation-style NCHW forward pass: one full block, mask-free kernel.
    _check((2, 4, 16, 16), k1)
    # Non-lane-divisible tiny tensor: wrapper tail / tiny-input path.
    _check((1, 3, 7, 11), k2)
    # Partial edge block + 2-core "parallel" split.
    _check((2, 4, 200, 200), k3)
    # Forced small blocks: multi-step grid, clamped duplicate block, edge mask.
    _check((2, 4, 200, 200), k4, max_block_rows=512)

    print("KERNEL_OK")
</pallas_src>

<mosaic_0001>
module attributes {stable_mosaic.version = 11 : i64} {
  func.func @_dice_partials_kernel(%arg0: i32, %arg1: i32, %arg2: memref<16x128xf32, #tpu.memory_space<vmem>>, %arg3: memref<16x128xf32, #tpu.memory_space<vmem>>, %arg4: memref<1x8x128xf32, #tpu.memory_space<vmem>>, %arg5: memref<1x8x128xf32, #tpu.memory_space<vmem>>, %arg6: memref<1x8x128xf32, #tpu.memory_space<vmem>>) attributes {dimension_semantics = [#tpu.dimension_semantics<parallel>, #tpu.dimension_semantics<arbitrary>], iteration_bounds = array<i64: 1, 1>, scalar_prefetch = 0 : i64, scratch_operands = 0 : i64, tpu.core_type = #tpu.core_type<tc>, window_params = [{transform_indices = @transform_0, window_bounds = array<i64: 16, 128>}, {transform_indices = @transform_1, window_bounds = array<i64: 16, 128>}, {transform_indices = @transform_2, window_bounds = array<i64: 1, 8, 128>}, {transform_indices = @transform_3, window_bounds = array<i64: 1, 8, 128>}, {transform_indices = @transform_4, window_bounds = array<i64: 1, 8, 128>}]} {
    %c0_i32 = arith.constant 0 : i32
    %0 = arith.cmpi eq, %arg1, %c0_i32 : i32
    %1 = arith.extui %0 : i1 to i32
    %c0_i32_0 = arith.constant 0 : i32
    %2 = arith.cmpi ne, %1, %c0_i32_0 : i32
    scf.if %2 {
      %cst_26 = arith.constant 0.000000e+00 : f32
      %30 = vector.broadcast %cst_26 : f32 to vector<1x8x128xf32>
      %c0_27 = arith.constant 0 : index
      %c0_28 = arith.constant 0 : index
      %c0_29 = arith.constant 0 : index
      %31 = vector.load %arg4[%c0_27, %c0_28, %c0_29] : memref<1x8x128xf32, #tpu.memory_space<vmem>>, vector<1x8x128xf32>
      tpu.vector_store %arg4[%c0_27, %c0_28, %c0_29], %30 {strides = array<i32>} : memref<1x8x128xf32, #tpu.memory_space<vmem>>, vector<1x8x128xf32>,
      %cst_30 = arith.constant 0.000000e+00 : f32
      %32 = vector.broadcast %cst_30 : f32 to vector<1x8x128xf32>
      %c0_31 = arith.constant 0 : index
      %c0_32 = arith.constant 0 : index
      %c0_33 = arith.constant 0 : index
      %33 = vector.load %arg5[%c0_31, %c0_32, %c0_33] : memref<1x8x128xf32, #tpu.memory_space<vmem>>, vector<1x8x128xf32>
      tpu.vector_store %arg5[%c0_31, %c0_32, %c0_33], %32 {strides = array<i32>} : memref<1x8x128xf32, #tpu.memory_space<vmem>>, vector<1x8x128xf32>,
      %cst_34 = arith.constant 0.000000e+00 : f32
      %34 = vector.broadcast %cst_34 : f32 to vector<1x8x128xf32>
      %c0_35 = arith.constant 0 : index
      %c0_36 = arith.constant 0 : index
      %c0_37 = arith.constant 0 : index
      %35 = vector.load %arg6[%c0_35, %c0_36, %c0_37] : memref<1x8x128xf32, #tpu.memory_space<vmem>>, vector<1x8x128xf32>
      tpu.vector_store %arg6[%c0_35, %c0_36, %c0_37], %34 {strides = array<i32>} : memref<1x8x128xf32, #tpu.memory_space<vmem>>, vector<1x8x128xf32>,
    } else {
    }
    %c0 = arith.constant 0 : index
    %c0_1 = arith.constant 0 : index
    %3 = vector.load %arg2[%c0, %c0_1] : memref<16x128xf32, #tpu.memory_space<vmem>>, vector<16x128xf32>
    %c0_2 = arith.constant 0 : index
    %c0_3 = arith.constant 0 : index
    %4 = vector.load %arg3[%c0_2, %c0_3] : memref<16x128xf32, #tpu.memory_space<vmem>>, vector<16x128xf32>
    %cst = arith.constant 0.000000e+00 : f32
    %5 = vector.broadcast %cst : f32 to vector<16x128xf32>
    %6 = arith.subf %5, %3 : vector<16x128xf32>
    %7 = math.exp %6 : vector<16x128xf32>
    %cst_4 = arith.constant 1.000000e+00 : f32
    %8 = vector.broadcast %cst_4 : f32 to vector<16x128xf32>
    %9 = arith.addf %8, %7 : vector<16x128xf32>
    %10 = tpu.reciprocal %9 {approx = true} : vector<16x128xf32> -> vector<16x128xf32>
    %c0_5 = arith.constant 0 : index
    %c0_6 = arith.constant 0 : index
    %c0_7 = arith.constant 0 : index
    %11 = vector.load %arg4[%c0_5, %c0_6, %c0_7] : memref<1x8x128xf32, #tpu.memory_space<vmem>>, vector<1x8x128xf32>
    %12 = arith.mulf %10, %4 : vector<16x128xf32>
    %13 = vector.shape_cast %12 : vector<16x128xf32> to vector<2x8x128xf32>
    %cst_8 = arith.constant dense<0.000000e+00> : vector<8x128xf32>
    %14 = vector.multi_reduction <add>, %13, %cst_8 [0] : vector<2x8x128xf32> to vector<8x128xf32>
    %15 = vector.shape_cast %14 : vector<8x128xf32> to vector<1x8x128xf32>
    %16 = arith.addf %11, %15 : vector<1x8x128xf32>
    %c0_9 = arith.constant 0 : index
    %c0_10 = arith.constant 0 : index
    %c0_11 = arith.constant 0 : index
    %17 = vector.load %arg4[%c0_9, %c0_10, %c0_11] : memref<1x8x128xf32, #tpu.memory_space<vmem>>, vector<1x8x128xf32>
    tpu.vector_store %arg4[%c0_9, %c0_10, %c0_11], %16 {strides = array<i32>} : memref<1x8x128xf32, #tpu.memory_space<vmem>>, vector<1x8x128xf32>,
    %c0_12 = arith.constant 0 : index
    %c0_13 = arith.constant 0 : index
    %c0_14 = arith.constant 0 : index
    %18 = vector.load %arg5[%c0_12, %c0_13, %c0_14] : memref<1x8x128xf32, #tpu.memory_space<vmem>>, vector<1x8x128xf32>
    %19 = vector.shape_cast %10 : vector<16x128xf32> to vector<2x8x128xf32>
    %cst_15 = arith.constant dense<0.000000e+00> : vector<8x128xf32>
    %20 = vector.multi_reduction <add>, %19, %cst_15 [0] : vector<2x8x128xf32> to vector<8x128xf32>
    %21 = vector.shape_cast %20 : vector<8x128xf32> to vector<1x8x128xf32>
    %22 = arith.addf %18, %21 : vector<1x8x128xf32>
    %c0_16 = arith.constant 0 : index
    %c0_17 = arith.constant 0 : index
    %c0_18 = arith.constant 0 : index
    %23 = vector.load %arg5[%c0_16, %c0_17, %c0_18] : memref<1x8x128xf32, #tpu.memory_space<vmem>>, vector<1x8x128xf32>
    tpu.vector_store %arg5[%c0_16, %c0_17, %c0_18], %22 {strides = array<i32>} : memref<1x8x128xf32, #tpu.memory_space<vmem>>, vector<1x8x128xf32>,
    %c0_19 = arith.constant 0 : index
    %c0_20 = arith.constant 0 : index
    %c0_21 = arith.constant 0 : index
    %24 = vector.load %arg6[%c0_19, %c0_20, %c0_21] : memref<1x8x128xf32, #tpu.memory_space<vmem>>, vector<1x8x128xf32>
    %25 = vector.shape_cast %4 : vector<16x128xf32> to vector<2x8x128xf32>
    %cst_22 = arith.constant dense<0.000000e+00> : vector<8x128xf32>
    %26 = vector.multi_reduction <add>, %25, %cst_22 [0] : vector<2x8x128xf32> to vector<8x128xf32>
    %27 = vector.shape_cast %26 : vector<8x128xf32> to vector<1x8x128xf32>
    %28 = arith.addf %24, %27 : vector<1x8x128xf32>
    %c0_23 = arith.constant 0 : index
    %c0_24 = arith.constant 0 : index
    %c0_25 = arith.constant 0 : index
    %29 = vector.load %arg6[%c0_23, %c0_24, %c0_25] : memref<1x8x128xf32, #tpu.memory_space<vmem>>, vector<1x8x128xf32>
    tpu.vector_store %arg6[%c0_23, %c0_24, %c0_25], %28 {strides = array<i32>} : memref<1x8x128xf32, #tpu.memory_space<vmem>>, vector<1x8x128xf32>,
    return
  }
  func.func @transform_0(%arg0: i32, %arg1: i32) -> (i32, i32) {
    %c1_i32 = arith.constant 1 : i32
    %0 = arith.muli %arg0, %c1_i32 : i32
    %1 = arith.addi %0, %arg1 : i32
    %c0_i32 = arith.constant 0 : i32
    %2 = arith.minsi %1, %c0_i32 : i32
    %c0_i32_0 = arith.constant 0 : i32
    %c0_i32_1 = arith.constant 0 : i32
    return %2, %c0_i32_0 : i32, i32
  }
  func.func @transform_1(%arg0: i32, %arg1: i32) -> (i32, i32) {
    %c1_i32 = arith.constant 1 : i32
    %0 = arith.muli %arg0, %c1_i32 : i32
    %1 = arith.addi %0, %arg1 : i32
    %c0_i32 = arith.constant 0 : i32
    %2 = arith.minsi %1, %c0_i32 : i32
    %c0_i32_0 = arith.constant 0 : i32
    %c0_i32_1 = arith.constant 0 : i32
    return %2, %c0_i32_0 : i32, i32
  }
  func.func @transform_2(%arg0: i32, %arg1: i32) -> (i32, i32, i32) {
    %c0_i32 = arith.constant 0 : i32
    %c0_i32_0 = arith.constant 0 : i32
    %c0_i32_1 = arith.constant 0 : i32
    return %arg0, %c0_i32, %c0_i32_0 : i32, i32, i32
  }
  func.func @transform_3(%arg0: i32, %arg1: i32) -> (i32, i32, i32) {
    %c0_i32 = arith.constant 0 : i32
    %c0_i32_0 = arith.constant 0 : i32
    %c0_i32_1 = arith.constant 0 : i32
    return %arg0, %c0_i32, %c0_i32_0 : i32, i32, i32
  }
  func.func @transform_4(%arg0: i32, %arg1: i32) -> (i32, i32, i32) {
    %c0_i32 = arith.constant 0 : i32
    %c0_i32_0 = arith.constant 0 : i32
    %c0_i32_1 = arith.constant 0 : i32
    return %arg0, %c0_i32, %c0_i32_0 : i32, i32, i32
  }
}

</mosaic_0001>

<llo_original>
// kernel: tpu_custom_call.1
$region0: #{tpu_custom_call.1}
  #allocation0 [shape = 'u32[]', space=smem, size = 0x4, offset = 0x4, fixed_abs, tag = 'smem constant byte address 0x4 - core index']
  #allocation1 [shape = 'u32[144,128]{1,0:T(1,128)}', space=vmem, size = 0x12000, scoped, tag = 'internal scratch']
  %s0 = inlined_call_operand.hbm [shape: f32[16,128], index: 0, kind: input, shape index: {}]
  %s1 = inlined_call_operand.hbm [shape: f32[16,128], index: 1, kind: input, shape index: {}]
  %s2 = inlined_call_operand.hbm [shape: f32[1,8,128], index: 2, kind: output, shape index: {0}]
  %s3 = inlined_call_operand.hbm [shape: f32[1,8,128], index: 3, kind: output, shape index: {1}]
  %s4 = inlined_call_operand.hbm [shape: f32[1,8,128], index: 4, kind: output, shape index: {2}]
  %5 = xla_tuple %s2, %s3, %s4
  %s6 = sld [smem:[#allocation0]]
  $region46: #{tpu_custom_call.1} parent=0
    _
  %s8 = ssub.s32 1, %s6
  %s9 = scalar_select 0, %s8, %s6
  $region1: #{tpu_custom_call.1} parent=0
    #allocation2 [shape = 'u8[8192]{0}', space=vmem, size = 0x2000, scoped, tag = 'input window, operand 0, single buffered']
    #allocation3 [shape = 's32[1]{0}', space=sflag, size = 0x4, scoped, tag = 'scoped memory for tpu_custom_call.1']
    #allocation4 [shape = 's32[1]{0}', space=sflag, size = 0x4, scoped, tag = 'scoped memory for tpu_custom_call.1']
    #allocation5 [shape = 'u8[8192]{0}', space=vmem, size = 0x2000, scoped, tag = 'input window, operand 1, single buffered']
    #allocation6 [shape = 's32[1]{0}', space=sflag, size = 0x4, scoped, tag = 'scoped memory for tpu_custom_call.1']
    #allocation7 [shape = 'u8[4096]{0}', space=vmem, size = 0x1000, scoped, tag = 'output window, operand 0, single buffered']
    #allocation8 [shape = 'u8[4096]{0}', space=vmem, size = 0x1000, scoped, tag = 'output window, operand 1, single buffered']
    #allocation9 [shape = 's32[1]{0}', space=sflag, size = 0x4, scoped, tag = 'scoped memory for tpu_custom_call.1']
    #allocation10 [shape = 'u8[4096]{0}', space=vmem, size = 0x1000, scoped, tag = 'output window, operand 2, single buffered']
    %10 = vsyncpa [#allocation3], 0
    %11 = vsyncpa [#allocation6], 0
    %12 = vsyncpa [#allocation4], 0
    %13 = vsyncpa [#allocation9], 0
    // Predicated region
    $region2: #{tpu_custom_call.1} parent=1 // pred_check
      _
    $region3: #{tpu_custom_call.1} parent=1 // pred_check_branch
      %15 = sbr.rel (0) target = $region5
    $region4: #{tpu_custom_call.1} parent=1 // pred_region
      %s16 = sadd.s32 0, 0
      %p17 = scmp.lt.s32.totalorder %s16, 0
      %s18 = scalar_select %p17, %s16, 0
      %s19 = smul.u32 2, %s18
      %s21 = ssub.s32 256, 256
      %22 = vsyncadd [#allocation3], %s21
      %s23 = smul.addr %s19, 128
      %s24 = scalar_lea.hbm %s0, %s23
      %s25 = sshll.u32 [#allocation2], 4
      %s26 = int_to_ptr.vmem [resolvable:$true] %s25
      %31 = dma.hbm_to_vmem [thread:$0]  %s24, 256, %s26, [#allocation3], 128, 128, 8
    $region5: #{tpu_custom_call.1} parent=1 // pred_fallthru
      _
    // Predicated region
    $region6: #{tpu_custom_call.1} parent=1 // pred_check
      _
    $region7: #{tpu_custom_call.1} parent=1 // pred_check_branch
      %33 = sbr.rel (0) target = $region9
    $region8: #{tpu_custom_call.1} parent=1 // pred_region
      %s34 = sadd.s32 0, 0
      %p35 = scmp.lt.s32.totalorder %s34, 0
      %s36 = scalar_select %p35, %s34, 0
      %s37 = smul.u32 2, %s36
      %s39 = ssub.s32 256, 256
      %40 = vsyncadd [#allocation6], %s39
      %s41 = smul.addr %s37, 128
      %s42 = scalar_lea.hbm %s1, %s41
      %s43 = sshll.u32 [#allocation5], 4
      %s44 = int_to_ptr.vmem [resolvable:$true] %s43
      %49 = dma.hbm_to_vmem [thread:$0]  %s42, 256, %s44, [#allocation6], 128, 128, 8
    $region9: #{tpu_custom_call.1} parent=1 // pred_fallthru
      _
    // Predicated region
    $region10: #{tpu_custom_call.1} parent=1 // pred_check
      _
    $region11: #{tpu_custom_call.1} parent=1 // pred_check_branch
      %51 = sbr.rel (0) target = $region13
    $region12: #{tpu_custom_call.1} parent=1 // pred_region
      %52 = dma.done [#allocation3], 256
    $region13: #{tpu_custom_call.1} parent=1 // pred_fallthru
      _
    // Predicated region
    $region14: #{tpu_custom_call.1} parent=1 // pred_check
      _
    $region15: #{tpu_custom_call.1} parent=1 // pred_check_branch
      %54 = sbr.rel (0) target = $region17
    $region16: #{tpu_custom_call.1} parent=1 // pred_region
      %55 = dma.done [#allocation6], 256
    $region17: #{tpu_custom_call.1} parent=1 // pred_fallthru
      _
    %s56 = sadd.s32 0, 0
    %p57 = scmp.lt.s32.totalorder %s56, 0
    %s58 = scalar_select %p57, %s56, 0
    %s59 = smul.u32 2, %s58
    %s60 = sadd.s32 0, 0
    %p61 = scmp.lt.s32.totalorder %s60, 0
    %s62 = scalar_select %p61, %s60, 0
    %s63 = smul.u32 2, %s62
    %p64 = scmp.eq.s32.totalorder 0, 0
    // Predicated region
    $region18: #{tpu_custom_call.1} parent=1 // pred_check
      %p65 = pneg %p64
    $region19: #{tpu_custom_call.1} parent=1 // pred_check_branch
      %67 = sbr.rel (%p65) target = $region21
    $region20: #{tpu_custom_call.1} parent=1 // pred_region
      %68 = vst [vmem:[#allocation7] sm:$0xff] 0.0
      %69 = vst [vmem:[#allocation8] sm:$0xff] 0.0
      %70 = vst [vmem:[#allocation10] sm:$0xff] 0.0
    $region21: #{tpu_custom_call.1} parent=1 // pred_fallthru
      _
    %v71 = vld [vmem:[#allocation2] sm:$0xff]
    %v72 = vld [vmem:[#allocation2 + $0x8] sm:$0xff]
    %v73 = vld [vmem:[#allocation5] sm:$0xff]
    %v74 = vld [vmem:[#allocation5 + $0x8] sm:$0xff]
    %v75 = vsub.f32 0.0, %v71
    %v76 = vsub.f32 0.0, %v72
    %v77 = vmul.f32 %v75, 1.442695
    %v78 = vpow.pop %v77
    %v79 = vmul.f32 %v76, 1.442695
    %v80 = vpow.pop %v79
    %v81 = vadd.f32 %v78, 1.0
    %v82 = vadd.f32 %v80, 1.0
    %v83 = vrcp.pop %v81
    %v84 = vrcp.pop %v82
    %v85 = vld [vmem:[#allocation7] sm:$0xff]
    %v86 = vmul.f32 %v83, %v73
    %v87 = vmul.f32 %v84, %v74
    %v88 = vadd.f32 %v86, %v87
    %v89 = vadd.f32 %v85, %v88
    %90 = vst [vmem:[#allocation7] sm:$0xff] %v89
    %v91 = vld [vmem:[#allocation8] sm:$0xff]
    %v92 = vadd.f32 %v83, %v84
    %v93 = vadd.f32 %v91, %v92
    %94 = vst [vmem:[#allocation8] sm:$0xff] %v93
    %v95 = vld [vmem:[#allocation10] sm:$0xff]
    %v96 = vadd.f32 %v73, %v74
    %v97 = vadd.f32 %v95, %v96
    %98 = vst [vmem:[#allocation10] sm:$0xff] %v97
    // Predicated region
    $region22: #{tpu_custom_call.1} parent=1 // pred_check
      _
    $region23: #{tpu_custom_call.1} parent=1 // pred_check_branch
      %100 = sbr.rel (0) target = $region25
    $region24: #{tpu_custom_call.1} parent=1 // pred_region
      %s102 = ssub.s32 128, 128
      %103 = vsyncadd [#allocation4], %s102
      %s105 = sshll.u32 [#allocation7], 4
      %s106 = int_to_ptr.vmem [resolvable:$true] %s105
      %108 = dma.vmem_to_hbm [thread:$0]  %s106, 128, %s2, [#allocation4]
    $region25: #{tpu_custom_call.1} parent=1 // pred_fallthru
      _
    // Predicated region
    $region26: #{tpu_custom_call.1} parent=1 // pred_check
      _
    $region27: #{tpu_custom_call.1} parent=1 // pred_check_branch
      %110 = sbr.rel (0) target = $region29
    $region28: #{tpu_custom_call.1} parent=1 // pred_region
      %s112 = ssub.s32 128, 128
      %113 = vsyncadd [#allocation9], %s112
      %s115 = sshll.u32 [#allocation8], 4
      %s116 = int_to_ptr.vmem [resolvable:$true] %s115
      %118 = dma.vmem_to_hbm [thread:$0]  %s116, 128, %s3, [#allocation9]
    $region29: #{tpu_custom_call.1} parent=1 // pred_fallthru
      _
    // Predicated region
    $region30: #{tpu_custom_call.1} parent=1 // pred_check
      _
    $region31: #{tpu_custom_call.1} parent=1 // pred_check_branch
      %120 = sbr.rel (0) target = $region33
    $region32: #{tpu_custom_call.1} parent=1 // pred_region
      %s122 = ssub.s32 128, 128
      %123 = vsyncadd [#allocation9], %s122
      %s125 = sshll.u32 [#allocation10], 4
      %s126 = int_to_ptr.vmem [resolvable:$true] %s125
      %128 = dma.vmem_to_hbm [thread:$0]  %s126, 128, %s4, [#allocation9]
    $region33: #{tpu_custom_call.1} parent=1 // pred_fallthru
      _
    // Predicated region
    $region34: #{tpu_custom_call.1} parent=1 // pred_check
      _
    $region35: #{tpu_custom_call.1} parent=1 // pred_check_branch
      %130 = sbr.rel (0) target = $region37
    $region36: #{tpu_custom_call.1} parent=1 // pred_region
      %131 = dma.done [#allocation4], 128
    $region37: #{tpu_custom_call.1} parent=1 // pred_fallthru
      _
    // Predicated region
    $region38: #{tpu_custom_call.1} parent=1 // pred_check
      _
    $region39: #{tpu_custom_call.1} parent=1 // pred_check_branch
      %133 = sbr.rel (0) target = $region41
    $region40: #{tpu_custom_call.1} parent=1 // pred_region
      %134 = dma.done [#allocation9], 128
    $region41: #{tpu_custom_call.1} parent=1 // pred_fallthru
      _
    // Predicated region
    $region42: #{tpu_custom_call.1} parent=1 // pred_check
      _
    $region43: #{tpu_custom_call.1} parent=1 // pred_check_branch
      %136 = sbr.rel (0) target = $region45
    $region44: #{tpu_custom_call.1} parent=1 // pred_region
      %137 = dma.done [#allocation9], 128
    $region45: #{tpu_custom_call.1} parent=1 // pred_fallthru
      _
    %138 = vsyncpa [#allocation3], 1
    %139 = vsyncpa [#allocation6], 1
    %140 = vsyncpa [#allocation4], 1
    %141 = vsyncpa [#allocation9], 1

</llo_original>
